<compile_context>
chip_gen: v6e
topology: v6e:2x2x1
jax: 0.10.0
libtpu: 0.0.40
codegen_flags: <defaults>
</compile_context>

<pallas_src>
import jax
import jax.numpy as jnp
from jax.experimental import pallas as pl
from jax.experimental.pallas import tpu as pltpu

# ------------------------- configuration (small shapes) -------------------------
B = 2                    # batch_size
N = 8                    # node_num
META = 16                # meta_dim (== self.d in MetaConv2d_update)
IN_C = 4                 # in_channels
OUT_C = 32               # out_channels
K = 3                    # kernel_size
S_IN = 8                 # seq_len_in
S_OUT = S_IN - K + 1     # 6 : F.conv2d, padding=0, stride=1
BN = B * N

NCONV = 2                          # main (= conv1 + conv2 folded offline) and gate (= conv3)
X_W = S_IN * IN_C                  # 32  : width of x / of one mk-piece block
U_W = (META + 1) * X_W             # 544 : [mk ⊗ x | x]  (the "x" block drives the generator bias)
BIG_W = U_W + META                 # 560 : + mk block (drives the generated conv bias)
LIN_W = NCONV * S_OUT * OUT_C      # 384 : (c, s, o) columns
OUT_W = S_OUT * OUT_C              # 192 : lane-dense output row width


# ------------------------- fused kernel ------------------------------------------
def meta_time_block_kernel(mk_ref, x_ref, wbig_ref, brow_ref, out_ref, big_ref):
    """Fused MetaTimeBlock forward.

    mk_ref  : (BN, META)          meta knowledge, one row per node
    x_ref   : (BN, S_IN*IN_C)     input, time-major (sin, i) -- pure reshape, no transpose
    wbig_ref: (BIG_W, LIN_W)      offline-packed (generator ∘ conv ∘ bias) matrix
    brow_ref: (1, LIN_W)          constant bias row (b_linear biases, conv0+conv1 pre-summed)
    out_ref : (BN, OUT_W)         relu(sigmoid(gate) * (conv1+conv2)), columns (s, o)
    big_ref : (BN, BIG_W)         VMEM scratch holding [ mk⊗x | x | mk ]
    """
    mk = mk_ref[...]                                   # (BN, META)
    x2 = x_ref[...]                                    # (BN, X_W)

    # rank-1 per-node features: big = [ mk[:,0]*x | ... | mk[:,15]*x | x | mk ]
    for m in range(META):                              # 16 lane-broadcast multiplies (tiny)
        big_ref[:, m * X_W:(m + 1) * X_W] = mk[:, m:m + 1] * x2
    big_ref[:, META * X_W:U_W] = x2                    # generator-bias block (weight "1")
    big_ref[:, U_W:BIG_W] = mk                         # conv-bias generator block

    # the whole block as one MXU matmul: (16, 560) @ (560, 384)
    lin = jnp.dot(big_ref[...], wbig_ref[...],
                  preferred_element_type=jnp.float32) + brow_ref[...]

    main = lin[:, :OUT_W]                              # conv1 + conv2 (folded offline)
    gate = jax.nn.sigmoid(lin[:, OUT_W:])              # conv3 -> sigmoid (EUP)
    out_ref[...] = jnp.maximum(gate * main, 0.0)       # relu(gate * tmp), lane-dense (16, 192)


# ------------------------- wrapper -----------------------------------------------
def meta_time_block_forward(packed, meta_knowledge, inp):
    """meta_knowledge: (B, N, META); inp: (B, N, S_IN, IN_C) -> (B, N, S_OUT, OUT_C)."""
    b, n, s_in, in_c = inp.shape
    bn = b * n
    mk = meta_knowledge.reshape(bn, META)              # metadata-only reshape
    x2 = inp.reshape(bn, s_in * in_c)                  # metadata-only reshape (time-major)
    out = pl.pallas_call(
        meta_time_block_kernel,
        out_shape=jax.ShapeDtypeStruct((bn, OUT_W), jnp.float32),
        scratch_shapes=[pltpu.VMEM((bn, BIG_W), jnp.float32)],
    )(mk, x2, packed['w_big'], packed['b_row'])
    return out.reshape(b, n, S_OUT, OUT_C)             # metadata-only reshape


# ------------------------- parameters (torch-equivalent layout) -------------------
def init_params(key):
    """Per-conv parameters matching the PyTorch module (stored feature-last / transposed):
       w1_t_c : w1_linear.weight.T  (META, IN_C*META), cols flat over (i, d)
       b1_c   : w1_linear.bias      (IN_C*META,)
       w2_t_c : w2_linear.weight.T  (META, OUT_C*K),   cols flat over (o, t)
       b2_c   : w2_linear.bias      (OUT_C*K,)
       wb_t_c : b_linear.weight.T   (META, OUT_C)
       bb_c   : b_linear.bias       (OUT_C,)
    """
    ks = jax.random.split(key, 18)

    def rn(k, shape, scale=0.1):
        return (scale * jax.random.normal(k, shape)).astype(jnp.float32)

    p, idx = {}, 0
    for c in range(3):
        p[f'w1_t_{c}'] = rn(ks[idx], (META, IN_C * META)); idx += 1
        p[f'b1_{c}'] = rn(ks[idx], (IN_C * META,)); idx += 1
        p[f'w2_t_{c}'] = rn(ks[idx], (META, OUT_C * K)); idx += 1
        p[f'b2_{c}'] = rn(ks[idx], (OUT_C * K,)); idx += 1
        p[f'wb_t_{c}'] = rn(ks[idx], (META, OUT_C)); idx += 1
        p[f'bb_{c}'] = rn(ks[idx], (OUT_C,)); idx += 1
    return p


def pack_params(p):
    """One-time offline folding (runs once, outside jit).

    Exact algebra:
      generated filter  w[n,i,o,t] = sum_m mk[n,m]*WF_c[m,i,t,o] + BF_c[i,t,o]
      generated bias    b[n,o]     = sum_m mk[n,m]*WB_c[m,o]     + BB_c[o]
      conv_c[n,s,o]     = sum_{i,t} x[n,s+t,i]*w[n,i,o,t] + b[n,o]
    conv1+conv2 are pre-summed (main), conv3 is the gate.  Everything is re-laid-out into a
    single matrix W_big whose rows follow the kernel's big = [mk⊗x | x | mk] column order
    (m, sin, i) and whose columns are (c, s, o); BB goes into a constant bias row.
    """
    def conv_pieces(c):
        w1_r = p[f'w1_t_{c}'].reshape(META, IN_C, META)        # [m, i, d]
        w2_r = p[f'w2_t_{c}'].reshape(META, OUT_C, K)          # [d, o, t]
        b2_to = p[f'b2_{c}'].reshape(OUT_C, K).T               # [t, o]
        wf = jnp.einsum('mid,dot->mito', w1_r, w2_r)           # (META, IN_C, K, OUT_C)
        bf = jnp.einsum('id,dot->ito',
                        p[f'b1_{c}'].reshape(IN_C, META), w2_r) + b2_to[None]   # (IN_C, K, OUT_C)
        return wf, bf, p[f'wb_t_{c}'], p[f'bb_{c}']

    wf0, bf0, wb0, bb0 = conv_pieces(0)
    wf1, bf1, wb1, bb1 = conv_pieces(1)
    wf2, bf2, wb2, bb2 = conv_pieces(2)

    # fold conv1+conv2 into "main" (exact); conv3 is the gate
    WF = jnp.stack([wf0 + wf1, wf2])          # (2, META, IN_C, K, OUT_C)
    BF = jnp.stack([bf0 + bf1, bf2])          # (2, IN_C, K, OUT_C)
    WB = jnp.stack([wb0 + wb1, wb2])          # (2, META, OUT_C)
    BB = jnp.stack([bb0 + bb1, bb2])          # (2, OUT_C)

    # append the generator-bias "row" as meta index 16 (it is driven by the plain-x block)
    WFa = jnp.concatenate([WF, BF[:, None]], axis=1)           # (2, META+1, IN_C, K, OUT_C)

    # conv rows (m', sin, i) -> cols (c, s, o); nonzero only where t = sin - s in [0, K)
    sin = jnp.arange(S_IN)[:, None]
    s = jnp.arange(S_OUT)[None, :]
    t_rel = sin - s                                            # (S_IN, S_OUT)
    valid = ((t_rel >= 0) & (t_rel < K)).astype(jnp.float32)
    t_idx = jnp.clip(t_rel, 0, K - 1)
    w_g = WFa[:, :, :, t_idx, :] * valid[None, None, None, :, :, None]  # (2,17,4,8,6,32)
    w_conv = jnp.transpose(w_g, (1, 3, 2, 0, 4, 5)).reshape(U_W, LIN_W)  # (544, 384)

    # conv-bias generator rows (m) -> cols (c, s, o), replicated over s
    w_bias = jnp.broadcast_to(jnp.transpose(WB, (1, 0, 2))[:, :, None, :],
                              (META, NCONV, S_OUT, OUT_C)).reshape(META, LIN_W)  # (16, 384)

    w_big = jnp.concatenate([w_conv, w_bias], axis=0)          # (560, 384)
    b_row = jnp.broadcast_to(BB[:, None, :], (NCONV, S_OUT, OUT_C)).reshape(1, LIN_W)
    return {'w_big': w_big, 'b_row': b_row}


# ------------------------- pure-JAX torch-faithful reference ----------------------
def _reference_conv(p, c, mk_flat, x):
    # MetaConv2d_update.forward: two Linears -> per-node grouped conv with generated bias
    w1o = mk_flat @ p[f'w1_t_{c}'] + p[f'b1_{c}']                          # (BN, IN_C*META)
    w1o = w1o.reshape(BN, IN_C, META)
    w2o = jnp.einsum('nid,dk->nik', w1o, p[f'w2_t_{c}']) + p[f'b2_{c}']    # (BN, IN_C, OUT_C*K)
    w = w2o.reshape(BN, IN_C, OUT_C, K)                                    # W[n, i, o, t]
    b_meta = mk_flat @ p[f'wb_t_{c}'] + p[f'bb_{c}']                       # (BN, OUT_C)
    out = jnp.zeros((BN, S_OUT, OUT_C), jnp.float32)
    for t in range(K):
        out = out + jnp.einsum('nsi,nio->nso', x[:, t:t + S_OUT, :], w[:, :, :, t])
    return out + b_meta[:, None, :]


def reference_forward(p, meta_knowledge, inp):
    mk_flat = meta_knowledge.reshape(BN, META)
    x = inp.reshape(BN, S_IN, IN_C)
    c1 = _reference_conv(p, 0, mk_flat, x)
    c2 = _reference_conv(p, 1, mk_flat, x)
    c3 = _reference_conv(p, 2, mk_flat, x)
    tmp = c1 + c2
    gate = jax.nn.sigmoid(c3)
    return jnp.maximum(gate * tmp, 0.0).reshape(B, N, S_OUT, OUT_C)


# ------------------------- main ---------------------------------------------------
if __name__ == "__main__":
    key = jax.random.PRNGKey(0)
    k_mk, k_x, k_p = jax.random.split(key, 3)
    meta_knowledge = jax.random.normal(k_mk, (B, N, META), dtype=jnp.float32)
    inp = jax.random.normal(k_x, (B, N, S_IN, IN_C), dtype=jnp.float32)

    params = init_params(k_p)         # torch-equivalent per-conv parameters
    packed = pack_params(params)      # one-time offline folding (outside jit)

    fwd = jax.jit(meta_time_block_forward)
    out = fwd(packed, meta_knowledge, inp)
    jax.block_until_ready(out)

    assert out.shape == (B, N, S_OUT, OUT_C)
    assert bool(jnp.all(jnp.isfinite(out)))
    assert bool(jnp.all(out >= 0.0))  # relu output is non-negative

    ref = reference_forward(params, meta_knowledge, inp)
    max_err = float(jnp.max(jnp.abs(out - ref)))
    assert bool(jnp.allclose(out, ref, rtol=1e-4, atol=1e-4)), f"max_err={max_err}"

    print("KERNEL_OK")
</pallas_src>

<mosaic_0001>
module attributes {stable_mosaic.version = 11 : i64} {
  func.func @meta_time_block_kernel(%arg0: memref<16x16xf32, #tpu.memory_space<vmem>>, %arg1: memref<16x32xf32, #tpu.memory_space<vmem>>, %arg2: memref<560x384xf32, #tpu.memory_space<vmem>>, %arg3: memref<1x384xf32, #tpu.memory_space<vmem>>, %arg4: memref<16x192xf32, #tpu.memory_space<vmem>>, %arg5: memref<16x560xf32, #tpu.memory_space<vmem>>) attributes {dimension_semantics = [], scalar_prefetch = 0 : i64, scratch_operands = 1 : i64, tpu.core_type = #tpu.core_type<tc>} {
    %c0 = arith.constant 0 : index
    %c0_0 = arith.constant 0 : index
    %0 = vector.load %arg0[%c0, %c0_0] : memref<16x16xf32, #tpu.memory_space<vmem>>, vector<16x16xf32>
    %c0_1 = arith.constant 0 : index
    %c0_2 = arith.constant 0 : index
    %1 = vector.load %arg1[%c0_1, %c0_2] : memref<16x32xf32, #tpu.memory_space<vmem>>, vector<16x32xf32>
    %2 = vector.extract_strided_slice %0 {offsets = [0, 0], sizes = [16, 1], strides = [1, 1]} : vector<16x16xf32> to vector<16x1xf32>
    %3 = vector.broadcast %2 : vector<16x1xf32> to vector<16x32xf32>
    %4 = arith.mulf %3, %1 : vector<16x32xf32>
    %c0_3 = arith.constant 0 : index
    %c0_4 = arith.constant 0 : index
    %5 = vector.load %arg5[%c0_3, %c0_4] : memref<16x560xf32, #tpu.memory_space<vmem>>, vector<16x32xf32>
    tpu.vector_store %arg5[%c0_3, %c0_4], %4 {strides = array<i32>} : memref<16x560xf32, #tpu.memory_space<vmem>>, vector<16x32xf32>,
    %6 = vector.extract_strided_slice %0 {offsets = [0, 1], sizes = [16, 1], strides = [1, 1]} : vector<16x16xf32> to vector<16x1xf32>
    %7 = vector.broadcast %6 : vector<16x1xf32> to vector<16x32xf32>
    %8 = arith.mulf %7, %1 : vector<16x32xf32>
    %c0_5 = arith.constant 0 : index
    %c32 = arith.constant 32 : index
    %9 = vector.load %arg5[%c0_5, %c32] : memref<16x560xf32, #tpu.memory_space<vmem>>, vector<16x32xf32>
    tpu.vector_store %arg5[%c0_5, %c32], %8 {strides = array<i32>} : memref<16x560xf32, #tpu.memory_space<vmem>>, vector<16x32xf32>,
    %10 = vector.extract_strided_slice %0 {offsets = [0, 2], sizes = [16, 1], strides = [1, 1]} : vector<16x16xf32> to vector<16x1xf32>
    %11 = vector.broadcast %10 : vector<16x1xf32> to vector<16x32xf32>
    %12 = arith.mulf %11, %1 : vector<16x32xf32>
    %c0_6 = arith.constant 0 : index
    %c64 = arith.constant 64 : index
    %13 = vector.load %arg5[%c0_6, %c64] : memref<16x560xf32, #tpu.memory_space<vmem>>, vector<16x32xf32>
    tpu.vector_store %arg5[%c0_6, %c64], %12 {strides = array<i32>} : memref<16x560xf32, #tpu.memory_space<vmem>>, vector<16x32xf32>,
    %14 = vector.extract_strided_slice %0 {offsets = [0, 3], sizes = [16, 1], strides = [1, 1]} : vector<16x16xf32> to vector<16x1xf32>
    %15 = vector.broadcast %14 : vector<16x1xf32> to vector<16x32xf32>
    %16 = arith.mulf %15, %1 : vector<16x32xf32>
    %c0_7 = arith.constant 0 : index
    %c96 = arith.constant 96 : index
    %17 = vector.load %arg5[%c0_7, %c96] : memref<16x560xf32, #tpu.memory_space<vmem>>, vector<16x32xf32>
    tpu.vector_store %arg5[%c0_7, %c96], %16 {strides = array<i32>} : memref<16x560xf32, #tpu.memory_space<vmem>>, vector<16x32xf32>,
    %18 = vector.extract_strided_slice %0 {offsets = [0, 4], sizes = [16, 1], strides = [1, 1]} : vector<16x16xf32> to vector<16x1xf32>
    %19 = vector.broadcast %18 : vector<16x1xf32> to vector<16x32xf32>
    %20 = arith.mulf %19, %1 : vector<16x32xf32>
    %c0_8 = arith.constant 0 : index
    %c128 = arith.constant 128 : index
    %21 = vector.load %arg5[%c0_8, %c128] : memref<16x560xf32, #tpu.memory_space<vmem>>, vector<16x32xf32>
    tpu.vector_store %arg5[%c0_8, %c128], %20 {strides = array<i32>} : memref<16x560xf32, #tpu.memory_space<vmem>>, vector<16x32xf32>,
    %22 = vector.extract_strided_slice %0 {offsets = [0, 5], sizes = [16, 1], strides = [1, 1]} : vector<16x16xf32> to vector<16x1xf32>
    %23 = vector.broadcast %22 : vector<16x1xf32> to vector<16x32xf32>
    %24 = arith.mulf %23, %1 : vector<16x32xf32>
    %c0_9 = arith.constant 0 : index
    %c160 = arith.constant 160 : index
    %25 = vector.load %arg5[%c0_9, %c160] : memref<16x560xf32, #tpu.memory_space<vmem>>, vector<16x32xf32>
    tpu.vector_store %arg5[%c0_9, %c160], %24 {strides = array<i32>} : memref<16x560xf32, #tpu.memory_space<vmem>>, vector<16x32xf32>,
    %26 = vector.extract_strided_slice %0 {offsets = [0, 6], sizes = [16, 1], strides = [1, 1]} : vector<16x16xf32> to vector<16x1xf32>
    %27 = vector.broadcast %26 : vector<16x1xf32> to vector<16x32xf32>
    %28 = arith.mulf %27, %1 : vector<16x32xf32>
    %c0_10 = arith.constant 0 : index
    %c192 = arith.constant 192 : index
    %29 = vector.load %arg5[%c0_10, %c192] : memref<16x560xf32, #tpu.memory_space<vmem>>, vector<16x32xf32>
    tpu.vector_store %arg5[%c0_10, %c192], %28 {strides = array<i32>} : memref<16x560xf32, #tpu.memory_space<vmem>>, vector<16x32xf32>,
    %30 = vector.extract_strided_slice %0 {offsets = [0, 7], sizes = [16, 1], strides = [1, 1]} : vector<16x16xf32> to vector<16x1xf32>
    %31 = vector.broadcast %30 : vector<16x1xf32> to vector<16x32xf32>
    %32 = arith.mulf %31, %1 : vector<16x32xf32>
    %c0_11 = arith.constant 0 : index
    %c224 = arith.constant 224 : index
    %33 = vector.load %arg5[%c0_11, %c224] : memref<16x560xf32, #tpu.memory_space<vmem>>, vector<16x32xf32>
    tpu.vector_store %arg5[%c0_11, %c224], %32 {strides = array<i32>} : memref<16x560xf32, #tpu.memory_space<vmem>>, vector<16x32xf32>,
    %34 = vector.extract_strided_slice %0 {offsets = [0, 8], sizes = [16, 1], strides = [1, 1]} : vector<16x16xf32> to vector<16x1xf32>
    %35 = vector.broadcast %34 : vector<16x1xf32> to vector<16x32xf32>
    %36 = arith.mulf %35, %1 : vector<16x32xf32>
    %c0_12 = arith.constant 0 : index
    %c256 = arith.constant 256 : index
    %37 = vector.load %arg5[%c0_12, %c256] : memref<16x560xf32, #tpu.memory_space<vmem>>, vector<16x32xf32>
    tpu.vector_store %arg5[%c0_12, %c256], %36 {strides = array<i32>} : memref<16x560xf32, #tpu.memory_space<vmem>>, vector<16x32xf32>,
    %38 = vector.extract_strided_slice %0 {offsets = [0, 9], sizes = [16, 1], strides = [1, 1]} : vector<16x16xf32> to vector<16x1xf32>
    %39 = vector.broadcast %38 : vector<16x1xf32> to vector<16x32xf32>
    %40 = arith.mulf %39, %1 : vector<16x32xf32>
    %c0_13 = arith.constant 0 : index
    %c288 = arith.constant 288 : index
    %41 = vector.load %arg5[%c0_13, %c288] : memref<16x560xf32, #tpu.memory_space<vmem>>, vector<16x32xf32>
    tpu.vector_store %arg5[%c0_13, %c288], %40 {strides = array<i32>} : memref<16x560xf32, #tpu.memory_space<vmem>>, vector<16x32xf32>,
    %42 = vector.extract_strided_slice %0 {offsets = [0, 10], sizes = [16, 1], strides = [1, 1]} : vector<16x16xf32> to vector<16x1xf32>
    %43 = vector.broadcast %42 : vector<16x1xf32> to vector<16x32xf32>
    %44 = arith.mulf %43, %1 : vector<16x32xf32>
    %c0_14 = arith.constant 0 : index
    %c320 = arith.constant 320 : index
    %45 = vector.load %arg5[%c0_14, %c320] : memref<16x560xf32, #tpu.memory_space<vmem>>, vector<16x32xf32>
    tpu.vector_store %arg5[%c0_14, %c320], %44 {strides = array<i32>} : memref<16x560xf32, #tpu.memory_space<vmem>>, vector<16x32xf32>,
    %46 = vector.extract_strided_slice %0 {offsets = [0, 11], sizes = [16, 1], strides = [1, 1]} : vector<16x16xf32> to vector<16x1xf32>
    %47 = vector.broadcast %46 : vector<16x1xf32> to vector<16x32xf32>
    %48 = arith.mulf %47, %1 : vector<16x32xf32>
    %c0_15 = arith.constant 0 : index
    %c352 = arith.constant 352 : index
    %49 = vector.load %arg5[%c0_15, %c352] : memref<16x560xf32, #tpu.memory_space<vmem>>, vector<16x32xf32>
    tpu.vector_store %arg5[%c0_15, %c352], %48 {strides = array<i32>} : memref<16x560xf32, #tpu.memory_space<vmem>>, vector<16x32xf32>,
    %50 = vector.extract_strided_slice %0 {offsets = [0, 12], sizes = [16, 1], strides = [1, 1]} : vector<16x16xf32> to vector<16x1xf32>
    %51 = vector.broadcast %50 : vector<16x1xf32> to vector<16x32xf32>
    %52 = arith.mulf %51, %1 : vector<16x32xf32>
    %c0_16 = arith.constant 0 : index
    %c384 = arith.constant 384 : index
    %53 = vector.load %arg5[%c0_16, %c384] : memref<16x560xf32, #tpu.memory_space<vmem>>, vector<16x32xf32>
    tpu.vector_store %arg5[%c0_16, %c384], %52 {strides = array<i32>} : memref<16x560xf32, #tpu.memory_space<vmem>>, vector<16x32xf32>,
    %54 = vector.extract_strided_slice %0 {offsets = [0, 13], sizes = [16, 1], strides = [1, 1]} : vector<16x16xf32> to vector<16x1xf32>
    %55 = vector.broadcast %54 : vector<16x1xf32> to vector<16x32xf32>
    %56 = arith.mulf %55, %1 : vector<16x32xf32>
    %c0_17 = arith.constant 0 : index
    %c416 = arith.constant 416 : index
    %57 = vector.load %arg5[%c0_17, %c416] : memref<16x560xf32, #tpu.memory_space<vmem>>, vector<16x32xf32>
    tpu.vector_store %arg5[%c0_17, %c416], %56 {strides = array<i32>} : memref<16x560xf32, #tpu.memory_space<vmem>>, vector<16x32xf32>,
    %58 = vector.extract_strided_slice %0 {offsets = [0, 14], sizes = [16, 1], strides = [1, 1]} : vector<16x16xf32> to vector<16x1xf32>
    %59 = vector.broadcast %58 : vector<16x1xf32> to vector<16x32xf32>
    %60 = arith.mulf %59, %1 : vector<16x32xf32>
    %c0_18 = arith.constant 0 : index
    %c448 = arith.constant 448 : index
    %61 = vector.load %arg5[%c0_18, %c448] : memref<16x560xf32, #tpu.memory_space<vmem>>, vector<16x32xf32>
    tpu.vector_store %arg5[%c0_18, %c448], %60 {strides = array<i32>} : memref<16x560xf32, #tpu.memory_space<vmem>>, vector<16x32xf32>,
    %62 = vector.extract_strided_slice %0 {offsets = [0, 15], sizes = [16, 1], strides = [1, 1]} : vector<16x16xf32> to vector<16x1xf32>
    %63 = vector.broadcast %62 : vector<16x1xf32> to vector<16x32xf32>
    %64 = arith.mulf %63, %1 : vector<16x32xf32>
    %c0_19 = arith.constant 0 : index
    %c480 = arith.constant 480 : index
    %65 = vector.load %arg5[%c0_19, %c480] : memref<16x560xf32, #tpu.memory_space<vmem>>, vector<16x32xf32>
    tpu.vector_store %arg5[%c0_19, %c480], %64 {strides = array<i32>} : memref<16x560xf32, #tpu.memory_space<vmem>>, vector<16x32xf32>,
    %c0_20 = arith.constant 0 : index
    %c512 = arith.constant 512 : index
    %66 = vector.load %arg5[%c0_20, %c512] : memref<16x560xf32, #tpu.memory_space<vmem>>, vector<16x32xf32>
    tpu.vector_store %arg5[%c0_20, %c512], %1 {strides = array<i32>} : memref<16x560xf32, #tpu.memory_space<vmem>>, vector<16x32xf32>,
    %c0_21 = arith.constant 0 : index
    %c544 = arith.constant 544 : index
    %67 = vector.load %arg5[%c0_21, %c544] : memref<16x560xf32, #tpu.memory_space<vmem>>, vector<16x16xf32>
    tpu.vector_store %arg5[%c0_21, %c544], %0 {strides = array<i32>} : memref<16x560xf32, #tpu.memory_space<vmem>>, vector<16x16xf32>,
    %c0_22 = arith.constant 0 : index
    %c0_23 = arith.constant 0 : index
    %68 = vector.load %arg5[%c0_22, %c0_23] : memref<16x560xf32, #tpu.memory_space<vmem>>, vector<16x560xf32>
    %c0_24 = arith.constant 0 : index
    %c0_25 = arith.constant 0 : index
    %69 = vector.load %arg2[%c0_24, %c0_25] : memref<560x384xf32, #tpu.memory_space<vmem>>, vector<560x384xf32>
    %cst = arith.constant dense<0.000000e+00> : vector<16x384xf32>
    %70 = tpu.matmul %68, %69, %cst {dimension_numbers = #tpu.dot_dimension_numbers<[1], [0], [0], [1], [0, 0, 1, 1], [], []>} : vector<16x560xf32>, vector<560x384xf32>, vector<16x384xf32> -> vector<16x384xf32>
    %c0_26 = arith.constant 0 : index
    %c0_27 = arith.constant 0 : index
    %71 = vector.load %arg3[%c0_26, %c0_27] : memref<1x384xf32, #tpu.memory_space<vmem>>, vector<1x384xf32>
    %72 = vector.broadcast %71 : vector<1x384xf32> to vector<16x384xf32>
    %73 = arith.addf %70, %72 : vector<16x384xf32>
    %74 = vector.extract_strided_slice %73 {offsets = [0, 0], sizes = [16, 192], strides = [1, 1]} : vector<16x384xf32> to vector<16x192xf32>
    %75 = vector.extract_strided_slice %73 {offsets = [0, 192], sizes = [16, 192], strides = [1, 1]} : vector<16x384xf32> to vector<16x192xf32>
    %76 = arith.negf %75 : vector<16x192xf32>
    %77 = math.exp %76 : vector<16x192xf32>
    %cst_28 = arith.constant 1.000000e+00 : f32
    %78 = vector.broadcast %cst_28 : f32 to vector<16x192xf32>
    %79 = arith.addf %78, %77 : vector<16x192xf32>
    %80 = arith.divf %78, %79 : vector<16x192xf32>
    %81 = arith.mulf %80, %74 : vector<16x192xf32>
    %cst_29 = arith.constant 0.000000e+00 : f32
    %82 = vector.broadcast %cst_29 : f32 to vector<16x192xf32>
    %83 = arith.maximumf %81, %82 : vector<16x192xf32>
    %c0_30 = arith.constant 0 : index
    %c0_31 = arith.constant 0 : index
    %84 = vector.load %arg4[%c0_30, %c0_31] : memref<16x192xf32, #tpu.memory_space<vmem>>, vector<16x192xf32>
    tpu.vector_store %arg4[%c0_30, %c0_31], %83 {strides = array<i32>} : memref<16x192xf32, #tpu.memory_space<vmem>>, vector<16x192xf32>,
    return
  }
}

</mosaic_0001>

<llo_original>
// kernel: meta_time_block_forward.1
$region0: #{meta_time_block_forward.1}
  #allocation0 [shape = 'u32[]', space=smem, size = 0x4, offset = 0x4, fixed_abs, tag = 'smem constant byte address 0x4 - core index']
  #allocation1 [shape = 'u32[144,128]{1,0:T(1,128)}', space=vmem, size = 0x12000, scoped, tag = 'internal scratch']
  #allocation2 [shape = 'f32[16,560]{1,0:T(8,128)}', space=vmem, size = 0xa000, scoped, tag = 'scratch operand']
  %s0 = inlined_call_operand.vmem [shape: f32[16,16], index: 0, kind: input, shape index: {}]
  %s1 = inlined_call_operand.vmem [shape: f32[16,32], index: 1, kind: input, shape index: {}]
  %s2 = inlined_call_operand.hbm [shape: f32[560,384], index: 2, kind: input, shape index: {}]
  %s3 = inlined_call_operand.vmem [shape: f32[1,384], index: 3, kind: input, shape index: {}]
  %s4 = inlined_call_operand.vmem [shape: f32[16,192], index: 4, kind: output, shape index: {}]
  %s5 = sld [smem:[#allocation0]]
  $region30: #{meta_time_block_forward.1} parent=0
    _
  %s7 = ssub.s32 1, %s5
  %s8 = scalar_select 0, %s7, %s5
  $region1: #{meta_time_block_forward.1} parent=0
    #allocation3 [shape = 'u8[860160]{0}', space=vmem, size = 0xd2000, scoped, tag = 'input window, operand 2, single buffered']
    #allocation4 [shape = 's32[1]{0}', space=sflag, size = 0x4, scoped, tag = 'scoped memory for meta_time_block_forward.1']
    %9 = vsyncpa [#allocation4], 0
    // Predicated region
    $region2: #{meta_time_block_forward.1} parent=1 // pred_check
      _
    $region3: #{meta_time_block_forward.1} parent=1 // pred_check_branch
      %11 = sbr.rel (0) target = $region5
    $region4: #{meta_time_block_forward.1} parent=1 // pred_region
      _
    $region5: #{meta_time_block_forward.1} parent=1 // pred_fallthru
      _
    // Predicated region
    $region6: #{meta_time_block_forward.1} parent=1 // pred_check
      _
    $region7: #{meta_time_block_forward.1} parent=1 // pred_check_branch
      %13 = sbr.rel (0) target = $region9
    $region8: #{meta_time_block_forward.1} parent=1 // pred_region
      _
    $region9: #{meta_time_block_forward.1} parent=1 // pred_fallthru
      _
    // Predicated region
    $region10: #{meta_time_block_forward.1} parent=1 // pred_check
      _
    $region11: #{meta_time_block_forward.1} parent=1 // pred_check_branch
      %15 = sbr.rel (0) target = $region13
    $region12: #{meta_time_block_forward.1} parent=1 // pred_region
      %s17 = ssub.s32 26880, 26880
      %18 = vsyncadd [#allocation4], %s17
      %s19 = sshll.u32 [#allocation3], 4
      %s20 = int_to_ptr.vmem [resolvable:$true] %s19
      %25 = dma.hbm_to_vmem [thread:$0]  %s2, 26880, %s20, [#allocation4], 384, 384, 24
    $region13: #{meta_time_block_forward.1} parent=1 // pred_fallthru
      _
    // Predicated region
    $region14: #{meta_time_block_forward.1} parent=1 // pred_check
      _
    $region15: #{meta_time_block_forward.1} parent=1 // pred_check_branch
      %27 = sbr.rel (0) target = $region17
    $region16: #{meta_time_block_forward.1} parent=1 // pred_region
      _
    $region17: #{meta_time_block_forward.1} parent=1 // pred_fallthru
      _
    // Predicated region
    $region18: #{meta_time_block_forward.1} parent=1 // pred_check
      _
    $region19: #{meta_time_block_forward.1} parent=1 // pred_check_branch
      %29 = sbr.rel (0) target = $region21
    $region20: #{meta_time_block_forward.1} parent=1 // pred_region
      %30 = dma.done [#allocation4], 26880
    $region21: #{meta_time_block_forward.1} parent=1 // pred_fallthru
      _
    %v31 = vld [vmem:[%s0] sm:$0xff]
    %v32 = vld [vmem:[%s0 + $0x8] sm:$0xff]
    %v33 = vld [vmem:[%s1] sm:$0xff]
    %v34 = vld [vmem:[%s1 + $0x8] sm:$0xff]
    %36 = vset.pattern.permute.xlu0 0
    %37 = vperm.xlu0 %36, %v31
    %v38 = vpop.permute.xlu0 %37
    %41 = vset.pattern.permute.xlu0 0
    %42 = vperm.xlu0 %41, %v32
    %v43 = vpop.permute.xlu0 %42
    %v45 = vmul.f32 %v38, %v33
    %v46 = vmul.f32 %v43, %v34
    %vm47 = vcmask 261120
    %48 = vst.msk [vmem:[#allocation2] sm:$0xff] %vm47, %v45
    %49 = vst.msk [vmem:[#allocation2 + $0x28] sm:$0xff] %vm47, %v46
    %50 = vset.pattern.permute.xlu0 1
    %51 = vperm.xlu0 %50, %v31
    %v52 = vpop.permute.xlu0 %51
    %54 = vset.pattern.permute.xlu0 1
    %55 = vperm.xlu0 %54, %v32
    %v56 = vpop.permute.xlu0 %55
    %v58 = vmul.f32 %v52, %v33
    %v59 = vmul.f32 %v56, %v34
    %62 = vrot.lane.b32.xlu0 %v58, 32
    %v63 = vpop.permute.xlu0 %62
    %64 = vrot.lane.b32.xlu0 %v59, 32
    %v65 = vpop.permute.xlu0 %64
    %vm68 = vcmask 523520
    %69 = vst.msk [vmem:[#allocation2] sm:$0xff] %vm68, %v63
    %70 = vst.msk [vmem:[#allocation2 + $0x28] sm:$0xff] %vm68, %v65
    %71 = vset.pattern.permute.xlu0 2
    %72 = vperm.xlu0 %71, %v31
    %v73 = vpop.permute.xlu0 %72
    %75 = vset.pattern.permute.xlu0 2
    %76 = vperm.xlu0 %75, %v32
    %v77 = vpop.permute.xlu0 %76
    %v79 = vmul.f32 %v73, %v33
    %v80 = vmul.f32 %v77, %v34
    %83 = vrot.lane.b32.xlu0 %v79, 64
    %v84 = vpop.permute.xlu0 %83
    %85 = vrot.lane.b32.xlu0 %v80, 64
    %v86 = vpop.permute.xlu0 %85
    %vm89 = vcmask 785920
    %90 = vst.msk [vmem:[#allocation2] sm:$0xff] %vm89, %v84
    %91 = vst.msk [vmem:[#allocation2 + $0x28] sm:$0xff] %vm89, %v86
    %92 = vset.pattern.permute.xlu0 3
    %93 = vperm.xlu0 %92, %v31
    %v94 = vpop.permute.xlu0 %93
    %96 = vset.pattern.permute.xlu0 3
    %97 = vperm.xlu0 %96, %v32
    %v98 = vpop.permute.xlu0 %97
    %v100 = vmul.f32 %v94, %v33
    %v101 = vmul.f32 %v98, %v34
    %104 = vrot.lane.b32.xlu0 %v100, 96
    %v105 = vpop.permute.xlu0 %104
    %106 = vrot.lane.b32.xlu0 %v101, 96
    %v107 = vpop.permute.xlu0 %106
    %vm110 = vcmask 1048320
    %111 = vst.msk [vmem:[#allocation2] sm:$0xff] %vm110, %v105
    %112 = vst.msk [vmem:[#allocation2 + $0x28] sm:$0xff] %vm110, %v107
    %113 = vset.pattern.permute.xlu0 4
    %114 = vperm.xlu0 %113, %v31
    %v115 = vpop.permute.xlu0 %114
    %117 = vset.pattern.permute.xlu0 4
    %118 = vperm.xlu0 %117, %v32
    %v119 = vpop.permute.xlu0 %118
    %v121 = vmul.f32 %v115, %v33
    %v122 = vmul.f32 %v119, %v34
    %123 = vst.msk [vmem:[#allocation2 + $0x8] sm:$0xff] %vm47, %v121
    %124 = vst.msk [vmem:[#allocation2 + $0x30] sm:$0xff] %vm47, %v122
    %125 = vset.pattern.permute.xlu0 5
    %126 = vperm.xlu0 %125, %v31
    %v127 = vpop.permute.xlu0 %126
    %129 = vset.pattern.permute.xlu0 5
    %130 = vperm.xlu0 %129, %v32
    %v131 = vpop.permute.xlu0 %130
    %v133 = vmul.f32 %v127, %v33
    %v134 = vmul.f32 %v131, %v34
    %137 = vrot.lane.b32.xlu0 %v133, 32
    %v138 = vpop.permute.xlu0 %137
    %139 = vrot.lane.b32.xlu0 %v134, 32
    %v140 = vpop.permute.xlu0 %139
    %143 = vst.msk [vmem:[#allocation2 + $0x8] sm:$0xff] %vm68, %v138
    %144 = vst.msk [vmem:[#allocation2 + $0x30] sm:$0xff] %vm68, %v140
    %145 = vset.pattern.permute.xlu0 6
    %146 = vperm.xlu0 %145, %v31
    %v147 = vpop.permute.xlu0 %146
    %149 = vset.pattern.permute.xlu0 6
    %150 = vperm.xlu0 %149, %v32
    %v151 = vpop.permute.xlu0 %150
    %v153 = vmul.f32 %v147, %v33
    %v154 = vmul.f32 %v151, %v34
    %157 = vrot.lane.b32.xlu0 %v153, 64
    %v158 = vpop.permute.xlu0 %157
    %159 = vrot.lane.b32.xlu0 %v154, 64
    %v160 = vpop.permute.xlu0 %159
    %163 = vst.msk [vmem:[#allocation2 + $0x8] sm:$0xff] %vm89, %v158
    %164 = vst.msk [vmem:[#allocation2 + $0x30] sm:$0xff] %vm89, %v160
    %165 = vset.pattern.permute.xlu0 7
    %166 = vperm.xlu0 %165, %v31
    %v167 = vpop.permute.xlu0 %166
    %169 = vset.pattern.permute.xlu0 7
    %170 = vperm.xlu0 %169, %v32
    %v171 = vpop.permute.xlu0 %170
    %v173 = vmul.f32 %v167, %v33
    %v174 = vmul.f32 %v171, %v34
    %177 = vrot.lane.b32.xlu0 %v173, 96
    %v178 = vpop.permute.xlu0 %177
    %179 = vrot.lane.b32.xlu0 %v174, 96
    %v180 = vpop.permute.xlu0 %179
    %183 = vst.msk [vmem:[#allocation2 + $0x8] sm:$0xff] %vm110, %v178
    %184 = vst.msk [vmem:[#allocation2 + $0x30] sm:$0xff] %vm110, %v180
    %185 = vset.pattern.permute.xlu0 8
    %186 = vperm.xlu0 %185, %v31
    %v187 = vpop.permute.xlu0 %186
    %189 = vset.pattern.permute.xlu0 8
    %190 = vperm.xlu0 %189, %v32
    %v191 = vpop.permute.xlu0 %190
    %v193 = vmul.f32 %v187, %v33
    %v194 = vmul.f32 %v191, %v34
    %195 = vst.msk [vmem:[#allocation2 + $0x10] sm:$0xff] %vm47, %v193
    %196 = vst.msk [vmem:[#allocation2 + $0x38] sm:$0xff] %vm47, %v194
    %197 = vset.pattern.permute.xlu0 9
    %198 = vperm.xlu0 %197, %v31
    %v199 = vpop.permute.xlu0 %198
    %201 = vset.pattern.permute.xlu0 9
    %202 = vperm.xlu0 %201, %v32
    %v203 = vpop.permute.xlu0 %202
    %v205 = vmul.f32 %v199, %v33
    %v206 = vmul.f32 %v203, %v34
    %209 = vrot.lane.b32.xlu0 %v205, 32
    %v210 = vpop.permute.xlu0 %209
    %211 = vrot.lane.b32.xlu0 %v206, 32
    %v212 = vpop.permute.xlu0 %211
    %215 = vst.msk [vmem:[#allocation2 + $0x10] sm:$0xff] %vm68, %v210
    %216 = vst.msk [vmem:[#allocation2 + $0x38] sm:$0xff] %vm68, %v212
    %217 = vset.pattern.permute.xlu0 10
    %218 = vperm.xlu0 %217, %v31
    %v219 = vpop.permute.xlu0 %218
    %221 = vset.pattern.permute.xlu0 10
    %222 = vperm.xlu0 %221, %v32
    %v223 = vpop.permute.xlu0 %222
    %v225 = vmul.f32 %v219, %v33
    %v226 = vmul.f32 %v223, %v34
    %229 = vrot.lane.b32.xlu0 %v225, 64
    %v230 = vpop.permute.xlu0 %229
    %231 = vrot.lane.b32.xlu0 %v226, 64
    %v232 = vpop.permute.xlu0 %231
    %235 = vst.msk [vmem:[#allocation2 + $0x10] sm:$0xff] %vm89, %v230
    %236 = vst.msk [vmem:[#allocation2 + $0x38] sm:$0xff] %vm89, %v232
    %237 = vset.pattern.permute.xlu0 11
    %238 = vperm.xlu0 %237, %v31
    %v239 = vpop.permute.xlu0 %238
    %241 = vset.pattern.permute.xlu0 11
    %242 = vperm.xlu0 %241, %v32
    %v243 = vpop.permute.xlu0 %242
    %v245 = vmul.f32 %v239, %v33
    %v246 = vmul.f32 %v243, %v34
    %249 = vrot.lane.b32.xlu0 %v245, 96
    %v250 = vpop.permute.xlu0 %249
    %251 = vrot.lane.b32.xlu0 %v246, 96
    %v252 = vpop.permute.xlu0 %251
    %255 = vst.msk [vmem:[#allocation2 + $0x10] sm:$0xff] %vm110, %v250
    %256 = vst.msk [vmem:[#allocation2 + $0x38] sm:$0xff] %vm110, %v252
    %257 = vset.pattern.permute.xlu0 12
    %258 = vperm.xlu0 %257, %v31
    %v259 = vpop.permute.xlu0 %258
    %261 = vset.pattern.permute.xlu0 12
    %262 = vperm.xlu0 %261, %v32
    %v263 = vpop.permute.xlu0 %262
    %v265 = vmul.f32 %v259, %v33
    %v266 = vmul.f32 %v263, %v34
    %267 = vst.msk [vmem:[#allocation2 + $0x18] sm:$0xff] %vm47, %v265
    %268 = vst.msk [vmem:[#allocation2 + $0x40] sm:$0xff] %vm47, %v266
    %269 = vset.pattern.permute.xlu0 13
    %270 = vperm.xlu0 %269, %v31
    %v271 = vpop.permute.xlu0 %270
    %273 = vset.pattern.permute.xlu0 13
    %274 = vperm.xlu0 %273, %v32
    %v275 = vpop.permute.xlu0 %274
    %v277 = vmul.f32 %v271, %v33
    %v278 = vmul.f32 %v275, %v34
    %281 = vrot.lane.b32.xlu0 %v277, 32
    %v282 = vpop.permute.xlu0 %281
    %283 = vrot.lane.b32.xlu0 %v278, 32
    %v284 = vpop.permute.xlu0 %283
    %287 = vst.msk [vmem:[#allocation2 + $0x18] sm:$0xff] %vm68, %v282
    %288 = vst.msk [vmem:[#allocation2 + $0x40] sm:$0xff] %vm68, %v284
    %289 = vset.pattern.permute.xlu0 14
    %290 = vperm.xlu0 %289, %v31
    %v291 = vpop.permute.xlu0 %290
    %293 = vset.pattern.permute.xlu0 14
    %294 = vperm.xlu0 %293, %v32
    %v295 = vpop.permute.xlu0 %294
    %v297 = vmul.f32 %v291, %v33
    %v298 = vmul.f32 %v295, %v34
    %301 = vrot.lane.b32.xlu0 %v297, 64
    %v302 = vpop.permute.xlu0 %301
    %303 = vrot.lane.b32.xlu0 %v298, 64
    %v304 = vpop.permute.xlu0 %303
    %307 = vst.msk [vmem:[#allocation2 + $0x18] sm:$0xff] %vm89, %v302
    %308 = vst.msk [vmem:[#allocation2 + $0x40] sm:$0xff] %vm89, %v304
    %309 = vset.pattern.permute.xlu0 15
    %310 = vperm.xlu0 %309, %v31
    %v311 = vpop.permute.xlu0 %310
    %313 = vset.pattern.permute.xlu0 15
    %314 = vperm.xlu0 %313, %v32
    %v315 = vpop.permute.xlu0 %314
    %v317 = vmul.f32 %v311, %v33
    %v318 = vmul.f32 %v315, %v34
    %321 = vrot.lane.b32.xlu0 %v317, 96
    %v322 = vpop.permute.xlu0 %321
    %323 = vrot.lane.b32.xlu0 %v318, 96
    %v324 = vpop.permute.xlu0 %323
    %327 = vst.msk [vmem:[#allocation2 + $0x18] sm:$0xff] %vm110, %v322
    %328 = vst.msk [vmem:[#allocation2 + $0x40] sm:$0xff] %vm110, %v324
    %329 = vst.msk [vmem:[#allocation2 + $0x20] sm:$0xff] %vm47, %v33
    %330 = vst.msk [vmem:[#allocation2 + $0x48] sm:$0xff] %vm47, %v34
    %331 = vrot.lane.b32.xlu0 %v31, 32
    %v332 = vpop.permute.xlu0 %331
    %333 = vrot.lane.b32.xlu0 %v32, 32
    %v334 = vpop.permute.xlu0 %333
    %vm337 = vcmask 392448
    %338 = vst.msk [vmem:[#allocation2 + $0x20] sm:$0xff] %vm337, %v332
    %339 = vst.msk [vmem:[#allocation2 + $0x48] sm:$0xff] %vm337, %v334
    %v340 = vld [vmem:[#allocation2] sm:$0xff]
    %v341 = vld [vmem:[#allocation2 + $0x8] sm:$0xff]
    %v342 = vld [vmem:[#allocation2 + $0x10] sm:$0xff]
    %v343 = vld [vmem:[#allocation2 + $0x18] sm:$0xff]
    %v344 = vld [vmem:[#allocation2 + $0x20] sm:$0xff]
    %v345 = vld [vmem:[#allocation2 + $0x28] sm:$0xff]
    %v346 = vld [vmem:[#allocation2 + $0x30] sm:$0xff]
    %v347 = vld [vmem:[#allocation2 + $0x38] sm:$0xff]
    %v348 = vld [vmem:[#allocation2 + $0x40] sm:$0xff]
    %v349 = vld [vmem:[#allocation2 + $0x48] sm:$0xff]
    %v350 = vld [vmem:[#allocation3] sm:$0xff]
    %v351 = vld [vmem:[#allocation3 + $0x8] sm:$0xff]
    %v352 = vld [vmem:[#allocation3 + $0x10] sm:$0xff]
    %v353 = vld [vmem:[#allocation3 + $0x18] sm:$0xff]
    %v354 = vld [vmem:[#allocation3 + $0x20] sm:$0xff]
    %v355 = vld [vmem:[#allocation3 + $0x28] sm:$0xff]
    %v356 = vld [vmem:[#allocation3 + $0x30] sm:$0xff]
    %v357 = vld [vmem:[#allocation3 + $0x38] sm:$0xff]
    %v358 = vld [vmem:[#allocation3 + $0x40] sm:$0xff]
    %v359 = vld [vmem:[#allocation3 + $0x48] sm:$0xff]
    %v360 = vld [vmem:[#allocation3 + $0x50] sm:$0xff]
    %v361 = vld [vmem:[#allocation3 + $0x58] sm:$0xff]
    %v362 = vld [vmem:[#allocation3 + $0x60] sm:$0xff]
    %v363 = vld [vmem:[#allocation3 + $0x68] sm:$0xff]
    %v364 = vld [vmem:[#allocation3 + $0x70] sm:$0xff]
    %v365 = vld [vmem:[#allocation3 + $0x78] sm:$0xff]
    %v366 = vld [vmem:[#allocation3 + $0x80] sm:$0xff]
    %v367 = vld [vmem:[#allocation3 + $0x88] sm:$0xff]
    %v368 = vld [vmem:[#allocation3 + $0x90] sm:$0xff]
    %v369 = vld [vmem:[#allocation3 + $0x98] sm:$0xff]
    %v370 = vld [vmem:[#allocation3 + $0xa0] sm:$0xff]
    %v371 = vld [vmem:[#allocation3 + $0xa8] sm:$0xff]
    %v372 = vld [vmem:[#allocation3 + $0xb0] sm:$0xff]
    %v373 = vld [vmem:[#allocation3 + $0xb8] sm:$0xff]
    %v374 = vld [vmem:[#allocation3 + $0xc0] sm:$0xff]
    %v375 = vld [vmem:[#allocation3 + $0xc8] sm:$0xff]
    %v376 = vld [vmem:[#allocation3 + $0xd0] sm:$0xff]
    %v377 = vld [vmem:[#allocation3 + $0xd8] sm:$0xff]
    %v378 = vld [vmem:[#allocation3 + $0xe0] sm:$0xff]
    %v379 = vld [vmem:[#allocation3 + $0xe8] sm:$0xff]
    %v380 = vld [vmem:[#allocation3 + $0xf0] sm:$0xff]
    %v381 = vld [vmem:[#allocation3 + $0xf8] sm:$0xff]
    %v382 = vld [vmem:[#allocation3 + $0x100] sm:$0xff]
    %v383 = vld [vmem:[#allocation3 + $0x108] sm:$0xff]
    %v384 = vld [vmem:[#allocation3 + $0x110] sm:$0xff]
    %v385 = vld [vmem:[#allocation3 + $0x118] sm:$0xff]
    %v386 = vld [vmem:[#allocation3 + $0x120] sm:$0xff]
    %v387 = vld [vmem:[#allocation3 + $0x128] sm:$0xff]
    %v388 = vld [vmem:[#allocation3 + $0x130] sm:$0xff]
    %v389 = vld [vmem:[#allocation3 + $0x138] sm:$0xff]
    %v390 = vld [vmem:[#allocation3 + $0x140] sm:$0xff]
    %v391 = vld [vmem:[#allocation3 + $0x148] sm:$0xff]
    %v392 = vld [vmem:[#allocation3 + $0x150] sm:$0xff]
    %v393 = vld [vmem:[#allocation3 + $0x158] sm:$0xff]
    %v394 = vld [vmem:[#allocation3 + $0x160] sm:$0xff]
    %v395 = vld [vmem:[#allocation3 + $0x168] sm:$0xff]
    %v396 = vld [vmem:[#allocation3 + $0x170] sm:$0xff]
    %v397 = vld [vmem:[#allocation3 + $0x178] sm:$0xff]
    %v398 = vld [vmem:[#allocation3 + $0x180] sm:$0xff]
    %v399 = vld [vmem:[#allocation3 + $0x188] sm:$0xff]
    %v400 = vld [vmem:[#allocation3 + $0x190] sm:$0xff]
    %v401 = vld [vmem:[#allocation3 + $0x198] sm:$0xff]
    %v402 = vld [vmem:[#allocation3 + $0x1a0] sm:$0xff]
    %v403 = vld [vmem:[#allocation3 + $0x1a8] sm:$0xff]
    %v404 = vld [vmem:[#allocation3 + $0x1b0] sm:$0xff]
    %v405 = vld [vmem:[#allocation3 + $0x1b8] sm:$0xff]
    %v406 = vld [vmem:[#allocation3 + $0x1c0] sm:$0xff]
    %v407 = vld [vmem:[#allocation3 + $0x1c8] sm:$0xff]
    %v408 = vld [vmem:[#allocation3 + $0x1d0] sm:$0xff]
    %v409 = vld [vmem:[#allocation3 + $0x1d8] sm:$0xff]
    %v410 = vld [vmem:[#allocation3 + $0x1e0] sm:$0xff]
    %v411 = vld [vmem:[#allocation3 + $0x1e8] sm:$0xff]
    %v412 = vld [vmem:[#allocation3 + $0x1f0] sm:$0xff]
    %v413 = vld [vmem:[#allocation3 + $0x1f8] sm:$0xff]
    %v414 = vld [vmem:[#allocation3 + $0x200] sm:$0xff]
    %v415 = vld [vmem:[#allocation3 + $0x208] sm:$0xff]
    %v416 = vld [vmem:[#allocation3 + $0x210] sm:$0xff]
    %v417 = vld [vmem:[#allocation3 + $0x218] sm:$0xff]
    %v418 = vld [vmem:[#allocation3 + $0x220] sm:$0xff]
    %v419 = vld [vmem:[#allocation3 + $0x228] sm:$0xff]
    %v420 = vld [vmem:[#allocation3 + $0x230] sm:$0xff]
    %v421 = vld [vmem:[#allocation3 + $0x238] sm:$0xff]
    %v422 = vld [vmem:[#allocation3 + $0x240] sm:$0xff]
    %v423 = vld [vmem:[#allocation3 + $0x248] sm:$0xff]
    %v424 = vld [vmem:[#allocation3 + $0x250] sm:$0xff]
    %v425 = vld [vmem:[#allocation3 + $0x258] sm:$0xff]
    %v426 = vld [vmem:[#allocation3 + $0x260] sm:$0xff]
    %v427 = vld [vmem:[#allocation3 + $0x268] sm:$0xff]
    %v428 = vld [vmem:[#allocation3 + $0x270] sm:$0xff]
    %v429 = vld [vmem:[#allocation3 + $0x278] sm:$0xff]
    %v430 = vld [vmem:[#allocation3 + $0x280] sm:$0xff]
    %v431 = vld [vmem:[#allocation3 + $0x288] sm:$0xff]
    %v432 = vld [vmem:[#allocation3 + $0x290] sm:$0xff]
    %v433 = vld [vmem:[#allocation3 + $0x298] sm:$0xff]
    %v434 = vld [vmem:[#allocation3 + $0x2a0] sm:$0xff]
    %v435 = vld [vmem:[#allocation3 + $0x2a8] sm:$0xff]
    %v436 = vld [vmem:[#allocation3 + $0x2b0] sm:$0xff]
    %v437 = vld [vmem:[#allocation3 + $0x2b8] sm:$0xff]
    %v438 = vld [vmem:[#allocation3 + $0x2c0] sm:$0xff]
    %v439 = vld [vmem:[#allocation3 + $0x2c8] sm:$0xff]
    %v440 = vld [vmem:[#allocation3 + $0x2d0] sm:$0xff]
    %v441 = vld [vmem:[#allocation3 + $0x2d8] sm:$0xff]
    %v442 = vld [vmem:[#allocation3 + $0x2e0] sm:$0xff]
    %v443 = vld [vmem:[#allocation3 + $0x2e8] sm:$0xff]
    %v444 = vld [vmem:[#allocation3 + $0x2f0] sm:$0xff]
    %v445 = vld [vmem:[#allocation3 + $0x2f8] sm:$0xff]
    %v446 = vld [vmem:[#allocation3 + $0x300] sm:$0xff]
    %v447 = vld [vmem:[#allocation3 + $0x308] sm:$0xff]
    %v448 = vld [vmem:[#allocation3 + $0x310] sm:$0xff]
    %v449 = vld [vmem:[#allocation3 + $0x318] sm:$0xff]
    %v450 = vld [vmem:[#allocation3 + $0x320] sm:$0xff]
    %v451 = vld [vmem:[#allocation3 + $0x328] sm:$0xff]
    %v452 = vld [vmem:[#allocation3 + $0x330] sm:$0xff]
    %v453 = vld [vmem:[#allocation3 + $0x338] sm:$0xff]
    %v454 = vld [vmem:[#allocation3 + $0x340] sm:$0xff]
    %v455 = vld [vmem:[#allocation3 + $0x348] sm:$0xff]
    %v456 = vld [vmem:[#allocation3 + $0x350] sm:$0xff]
    %v457 = vld [vmem:[#allocation3 + $0x358] sm:$0xff]
    %v458 = vld [vmem:[#allocation3 + $0x360] sm:$0xff]
    %v459 = vld [vmem:[#allocation3 + $0x368] sm:$0xff]
    %v460 = vld [vmem:[#allocation3 + $0x370] sm:$0xff]
    %v461 = vld [vmem:[#allocation3 + $0x378] sm:$0xff]
    %v462 = vld [vmem:[#allocation3 + $0x380] sm:$0xff]
    %v463 = vld [vmem:[#allocation3 + $0x388] sm:$0xff]
    %v464 = vld [vmem:[#allocation3 + $0x390] sm:$0xff]
    %v465 = vld [vmem:[#allocation3 + $0x398] sm:$0xff]
    %v466 = vld [vmem:[#allocation3 + $0x3a0] sm:$0xff]
    %v467 = vld [vmem:[#allocation3 + $0x3a8] sm:$0xff]
    %v468 = vld [vmem:[#allocation3 + $0x3b0] sm:$0xff]
    %v469 = vld [vmem:[#allocation3 + $0x3b8] sm:$0xff]
    %v470 = vld [vmem:[#allocation3 + $0x3c0] sm:$0xff]
    %v471 = vld [vmem:[#allocation3 + $0x3c8] sm:$0xff]
    %v472 = vld [vmem:[#allocation3 + $0x3d0] sm:$0xff]
    %v473 = vld [vmem:[#allocation3 + $0x3d8] sm:$0xff]
    %v474 = vld [vmem:[#allocation3 + $0x3e0] sm:$0xff]
    %v475 = vld [vmem:[#allocation3 + $0x3e8] sm:$0xff]
    %v476 = vld [vmem:[#allocation3 + $0x3f0] sm:$0xff]
    %v477 = vld [vmem:[#allocation3 + $0x3f8] sm:$0xff]
    %v478 = vld [vmem:[#allocation3 + $0x400] sm:$0xff]
    %v479 = vld [vmem:[#allocation3 + $0x408] sm:$0xff]
    %v480 = vld [vmem:[#allocation3 + $0x410] sm:$0xff]
    %v481 = vld [vmem:[#allocation3 + $0x418] sm:$0xff]
    %v482 = vld [vmem:[#allocation3 + $0x420] sm:$0xff]
    %v483 = vld [vmem:[#allocation3 + $0x428] sm:$0xff]
    %v484 = vld [vmem:[#allocation3 + $0x430] sm:$0xff]
    %v485 = vld [vmem:[#allocation3 + $0x438] sm:$0xff]
    %v486 = vld [vmem:[#allocation3 + $0x440] sm:$0xff]
    %v487 = vld [vmem:[#allocation3 + $0x448] sm:$0xff]
    %v488 = vld [vmem:[#allocation3 + $0x450] sm:$0xff]
    %v489 = vld [vmem:[#allocation3 + $0x458] sm:$0xff]
    %v490 = vld [vmem:[#allocation3 + $0x460] sm:$0xff]
    %v491 = vld [vmem:[#allocation3 + $0x468] sm:$0xff]
    %v492 = vld [vmem:[#allocation3 + $0x470] sm:$0xff]
    %v493 = vld [vmem:[#allocation3 + $0x478] sm:$0xff]
    %v494 = vld [vmem:[#allocation3 + $0x480] sm:$0xff]
    %v495 = vld [vmem:[#allocation3 + $0x488] sm:$0xff]
    %v496 = vld [vmem:[#allocation3 + $0x490] sm:$0xff]
    %v497 = vld [vmem:[#allocation3 + $0x498] sm:$0xff]
    %v498 = vld [vmem:[#allocation3 + $0x4a0] sm:$0xff]
    %v499 = vld [vmem:[#allocation3 + $0x4a8] sm:$0xff]
    %v500 = vld [vmem:[#allocation3 + $0x4b0] sm:$0xff]
    %v501 = vld [vmem:[#allocation3 + $0x4b8] sm:$0xff]
    %v502 = vld [vmem:[#allocation3 + $0x4c0] sm:$0xff]
    %v503 = vld [vmem:[#allocation3 + $0x4c8] sm:$0xff]
    %v504 = vld [vmem:[#allocation3 + $0x4d0] sm:$0xff]
    %v505 = vld [vmem:[#allocation3 + $0x4d8] sm:$0xff]
    %v506 = vld [vmem:[#allocation3 + $0x4e0] sm:$0xff]
    %v507 = vld [vmem:[#allocation3 + $0x4e8] sm:$0xff]
    %v508 = vld [vmem:[#allocation3 + $0x4f0] sm:$0xff]
    %v509 = vld [vmem:[#allocation3 + $0x4f8] sm:$0xff]
    %v510 = vld [vmem:[#allocation3 + $0x500] sm:$0xff]
    %v511 = vld [vmem:[#allocation3 + $0x508] sm:$0xff]
    %v512 = vld [vmem:[#allocation3 + $0x510] sm:$0xff]
    %v513 = vld [vmem:[#allocation3 + $0x518] sm:$0xff]
    %v514 = vld [vmem:[#allocation3 + $0x520] sm:$0xff]
    %v515 = vld [vmem:[#allocation3 + $0x528] sm:$0xff]
    %v516 = vld [vmem:[#allocation3 + $0x530] sm:$0xff]
    %v517 = vld [vmem:[#allocation3 + $0x538] sm:$0xff]
    %v518 = vld [vmem:[#allocation3 + $0x540] sm:$0xff]
    %v519 = vld [vmem:[#allocation3 + $0x548] sm:$0xff]
    %v520 = vld [vmem:[#allocation3 + $0x550] sm:$0xff]
    %v521 = vld [vmem:[#allocation3 + $0x558] sm:$0xff]
    %v522 = vld [vmem:[#allocation3 + $0x560] sm:$0xff]
    %v523 = vld [vmem:[#allocation3 + $0x568] sm:$0xff]
    %v524 = vld [vmem:[#allocation3 + $0x570] sm:$0xff]
    %v525 = vld [vmem:[#allocation3 + $0x578] sm:$0xff]
    %v526 = vld [vmem:[#allocation3 + $0x580] sm:$0xff]
    %v527 = vld [vmem:[#allocation3 + $0x588] sm:$0xff]
    %v528 = vld [vmem:[#allocation3 + $0x590] sm:$0xff]
    %v529 = vld [vmem:[#allocation3 + $0x598] sm:$0xff]
    %v530 = vld [vmem:[#allocation3 + $0x5a0] sm:$0xff]
    %v531 = vld [vmem:[#allocation3 + $0x5a8] sm:$0xff]
    %v532 = vld [vmem:[#allocation3 + $0x5b0] sm:$0xff]
    %v533 = vld [vmem:[#allocation3 + $0x5b8] sm:$0xff]
    %v534 = vld [vmem:[#allocation3 + $0x5c0] sm:$0xff]
    %v535 = vld [vmem:[#allocation3 + $0x5c8] sm:$0xff]
    %v536 = vld [vmem:[#allocation3 + $0x5d0] sm:$0xff]
    %v537 = vld [vmem:[#allocation3 + $0x5d8] sm:$0xff]
    %v538 = vld [vmem:[#allocation3 + $0x5e0] sm:$0xff]
    %v539 = vld [vmem:[#allocation3 + $0x5e8] sm:$0xff]
    %v540 = vld [vmem:[#allocation3 + $0x5f0] sm:$0xff]
    %v541 = vld [vmem:[#allocation3 + $0x5f8] sm:$0xff]
    %v542 = vld [vmem:[#allocation3 + $0x600] sm:$0xff]
    %v543 = vld [vmem:[#allocation3 + $0x608] sm:$0xff]
    %v544 = vld [vmem:[#allocation3 + $0x610] sm:$0xff]
    %v545 = vld [vmem:[#allocation3 + $0x618] sm:$0xff]
    %v546 = vld [vmem:[#allocation3 + $0x620] sm:$0xff]
    %v547 = vld [vmem:[#allocation3 + $0x628] sm:$0xff]
    %v548 = vld [vmem:[#allocation3 + $0x630] sm:$0xff]
    %v549 = vld [vmem:[#allocation3 + $0x638] sm:$0xff]
    %v550 = vld [vmem:[#allocation3 + $0x640] sm:$0xff]
    %v551 = vld [vmem:[#allocation3 + $0x648] sm:$0xff]
    %v552 = vld [vmem:[#allocation3 + $0x650] sm:$0xff]
    %v553 = vld [vmem:[#allocation3 + $0x658] sm:$0xff]
    %v554 = vld [vmem:[#allocation3 + $0x660] sm:$0xff]
    %v555 = vld [vmem:[#allocation3 + $0x668] sm:$0xff]
    %v556 = vld [vmem:[#allocation3 + $0x670] sm:$0xff]
    %v557 = vld [vmem:[#allocation3 + $0x678] sm:$0xff]
    %v558 = vld [vmem:[#allocation3 + $0x680] sm:$0xff]
    %v559 = vld [vmem:[#allocation3 + $0x688] sm:$0xff]
    %v560 = vld [vmem:[%s3] sm:$0x7]
    %v562 = vlaneseq
    %v563 = vshrl.u32 %v562, 7
    %v564 = vsub.s32 0, %v563
    %v565 = vrot.slane %v560, %v564
    %v566 = vlaneseq
    %v567 = vshrl.u32 %v566, 7
    %v568 = vsub.s32 1, %v567
    %v569 = vrot.slane %v560, %v568
    %v570 = vlaneseq
    %v571 = vshrl.u32 %v570, 7
    %v572 = vsub.s32 2, %v571
    %v573 = vrot.slane %v560, %v572
    %vm577 = vcmask 392192
    %v579 = vsel %vm577, %v344, 0
    %v582 = vsel %vm577, %v349, 0
    %584 = vmatprep.subr.mxu0 %v396
    %585 = vmatpush1.msra.mxu0 %v395
    %586 = vmatprep.subr.mxu0 %v393
    %587 = vmatpush1.msra.mxu0 %v392
    %588 = vmatprep.subr.mxu0 %v390
    %589 = vmatpush1.msra.mxu0 %v389
    %590 = vmatprep.subr.mxu0 %v387
    %591 = vmatpush1.msra.mxu0 %v386
    %592 = vmatprep.subr.mxu0 %v384
    %593 = vmatpush1.msra.mxu0 %v383
    %594 = vmatprep.subr.mxu0 %v381
    %595 = vmatpush1.msra.mxu0 %v380
    %596 = vmatprep.subr.mxu0 %v378
    %597 = vmatpush1.msra.mxu0 %v377
    %598 = vmatprep.subr.mxu0 %v375
    %599 = vmatpush1.msra.mxu0 %v374
    %600 = vmatprep.subr.mxu0 %v372
    %601 = vmatpush1.msra.mxu0 %v371
    %602 = vmatprep.subr.mxu0 %v369
    %603 = vmatpush1.msra.mxu0 %v368
    %604 = vmatprep.subr.mxu0 %v366
    %605 = vmatpush1.msra.mxu0 %v365
    %606 = vmatprep.subr.mxu0 %v363
    %607 = vmatpush1.msra.mxu0 %v362
    %608 = vmatprep.subr.mxu0 %v360
    %609 = vmatpush1.msra.mxu0 %v359
    %610 = vmatprep.subr.mxu0 %v357
    %611 = vmatpush1.msra.mxu0 %v356
    %612 = vmatprep.subr.mxu0 %v354
    %613 = vmatpush1.msra.mxu0 %v353
    %614 = vmatprep.subr.mxu0 %v351
    %615 = vmatpush1.msra.mxu0 %v350
    %616 = vmatprep.subr.mxu0 %v444
    %617 = vmatpush2.msra.mxu0 %v443
    %618 = vmatprep.subr.mxu0 %v441
    %619 = vmatpush2.msra.mxu0 %v440
    %620 = vmatprep.subr.mxu0 %v438
    %621 = vmatpush2.msra.mxu0 %v437
    %622 = vmatprep.subr.mxu0 %v435
    %623 = vmatpush2.msra.mxu0 %v434
    %624 = vmatprep.subr.mxu0 %v432
    %625 = vmatpush2.msra.mxu0 %v431
    %626 = vmatprep.subr.mxu0 %v429
    %627 = vmatpush2.msra.mxu0 %v428
    %628 = vmatprep.subr.mxu0 %v426
    %629 = vmatpush2.msra.mxu0 %v425
    %630 = vmatprep.subr.mxu0 %v423
    %631 = vmatpush2.msra.mxu0 %v422
    %632 = vmatprep.subr.mxu0 %v420
    %633 = vmatpush2.msra.mxu0 %v419
    %634 = vmatprep.subr.mxu0 %v417
    %635 = vmatpush2.msra.mxu0 %v416
    %636 = vmatprep.subr.mxu0 %v414
    %637 = vmatpush2.msra.mxu0 %v413
    %638 = vmatprep.subr.mxu0 %v411
    %639 = vmatpush2.msra.mxu0 %v410
    %640 = vmatprep.subr.mxu0 %v408
    %641 = vmatpush2.msra.mxu0 %v407
    %642 = vmatprep.subr.mxu0 %v405
    %643 = vmatpush2.msra.mxu0 %v404
    %644 = vmatprep.subr.mxu0 %v402
    %645 = vmatpush2.msra.mxu0 %v401
    %646 = vmatprep.subr.mxu0 %v399
    %647 = vmatpush2.msra.mxu0 %v398
    %648 = vmatprep.mubr.f32.mxu0 %v341
    %649 = vmatmul.mubr.f32.gmra.mxu0 %v340
    %v650 = vpop.f32.mrf.mxu0
    %v651 = vadd.f32 %v565, %v650
    %v652 = vpop.f32.mrf.mxu0
    %v653 = vadd.f32 %v569, %v652
    %654 = vmatprep.mubr.f32.mxu0 %v346
    %655 = vmatmul.mubr.f32.gmra.mxu0 %v345
    %v656 = vpop.f32.mrf.mxu0
    %v657 = vadd.f32 %v565, %v656
    %v658 = vpop.f32.mrf.mxu0
    %v659 = vadd.f32 %v569, %v658
    %660 = vdwg.mxu0
    %661 = vmatprep.subr.mxu0 %v492
    %662 = vmatpush1.msra.mxu0 %v491
    %663 = vmatprep.subr.mxu0 %v489
    %664 = vmatpush1.msra.mxu0 %v488
    %665 = vmatprep.subr.mxu0 %v486
    %666 = vmatpush1.msra.mxu0 %v485
    %667 = vmatprep.subr.mxu0 %v483
    %668 = vmatpush1.msra.mxu0 %v482
    %669 = vmatprep.subr.mxu0 %v480
    %670 = vmatpush1.msra.mxu0 %v479
    %671 = vmatprep.subr.mxu0 %v477
    %672 = vmatpush1.msra.mxu0 %v476
    %673 = vmatprep.subr.mxu0 %v474
    %674 = vmatpush1.msra.mxu0 %v473
    %675 = vmatprep.subr.mxu0 %v471
    %676 = vmatpush1.msra.mxu0 %v470
    %677 = vmatprep.subr.mxu0 %v468
    %678 = vmatpush1.msra.mxu0 %v467
    %679 = vmatprep.subr.mxu0 %v465
    %680 = vmatpush1.msra.mxu0 %v464
    %681 = vmatprep.subr.mxu0 %v462
    %682 = vmatpush1.msra.mxu0 %v461
    %683 = vmatprep.subr.mxu0 %v459
    %684 = vmatpush1.msra.mxu0 %v458
    %685 = vmatprep.subr.mxu0 %v456
    %686 = vmatpush1.msra.mxu0 %v455
    %687 = vmatprep.subr.mxu0 %v453
    %688 = vmatpush1.msra.mxu0 %v452
    %689 = vmatprep.subr.mxu0 %v450
    %690 = vmatpush1.msra.mxu0 %v449
    %691 = vmatprep.subr.mxu0 %v447
    %692 = vmatpush1.msra.mxu0 %v446
    %693 = vmatprep.subr.mxu0 %v540
    %694 = vmatpush2.msra.mxu0 %v539
    %695 = vmatprep.subr.mxu0 %v537
    %696 = vmatpush2.msra.mxu0 %v536
    %697 = vmatprep.subr.mxu0 %v534
    %698 = vmatpush2.msra.mxu0 %v533
    %699 = vmatprep.subr.mxu0 %v531
    %700 = vmatpush2.msra.mxu0 %v530
    %701 = vmatprep.subr.mxu0 %v528
    %702 = vmatpush2.msra.mxu0 %v527
    %703 = vmatprep.subr.mxu0 %v525
    %704 = vmatpush2.msra.mxu0 %v524
    %705 = vmatprep.subr.mxu0 %v522
    %706 = vmatpush2.msra.mxu0 %v521
    %707 = vmatprep.subr.mxu0 %v519
    %708 = vmatpush2.msra.mxu0 %v518
    %709 = vmatprep.subr.mxu0 %v516
    %710 = vmatpush2.msra.mxu0 %v515
    %711 = vmatprep.subr.mxu0 %v513
    %712 = vmatpush2.msra.mxu0 %v512
    %713 = vmatprep.subr.mxu0 %v510
    %714 = vmatpush2.msra.mxu0 %v509
    %715 = vmatprep.subr.mxu0 %v507
    %716 = vmatpush2.msra.mxu0 %v506
    %717 = vmatprep.subr.mxu0 %v504
    %718 = vmatpush2.msra.mxu0 %v503
    %719 = vmatprep.subr.mxu0 %v501
    %720 = vmatpush2.msra.mxu0 %v500
    %721 = vmatprep.subr.mxu0 %v498
    %722 = vmatpush2.msra.mxu0 %v497
    %723 = vmatprep.subr.mxu0 %v495
    %724 = vmatpush2.msra.mxu0 %v494
    %725 = vmatprep.mubr.f32.mxu0 %v343
    %726 = vmatmul.mubr.f32.gmra.mxu0 %v342
    %v727 = vpop.f32.mrf.mxu0
    %v728 = vadd.f32 %v651, %v727
    %v729 = vpop.f32.mrf.mxu0
    %v730 = vadd.f32 %v653, %v729
    %731 = vmatprep.mubr.f32.mxu0 %v348
    %732 = vmatmul.mubr.f32.gmra.mxu0 %v347
    %v733 = vpop.f32.mrf.mxu0
    %v734 = vadd.f32 %v657, %v733
    %v735 = vpop.f32.mrf.mxu0
    %v736 = vadd.f32 %v659, %v735
    %737 = vdwg.mxu0
    %738 = vmatprep.subr.mxu0 0.0
    %739 = vmatpush1.msra.mxu0 0.0
    %740 = vmatprep.subr.mxu0 0.0
    %741 = vmatpush1.msra.mxu0 0.0
    %742 = vmatprep.subr.mxu0 0.0
    %743 = vmatpush1.msra.mxu0 0.0
    %744 = vmatprep.subr.mxu0 0.0
    %745 = vmatpush1.msra.mxu0 0.0
    %746 = vmatprep.subr.mxu0 0.0
    %747 = vmatpush1.msra.mxu0 0.0
    %748 = vmatprep.subr.mxu0 0.0
    %749 = vmatpush1.msra.mxu0 0.0
    %750 = vmatprep.subr.mxu0 0.0
    %751 = vmatpush1.msra.mxu0 0.0
    %752 = vmatprep.subr.mxu0 0.0
    %753 = vmatpush1.msra.mxu0 0.0
    %754 = vmatprep.subr.mxu0 0.0
    %755 = vmatpush1.msra.mxu0 0.0
    %756 = vmatprep.subr.mxu0 0.0
    %757 = vmatpush1.msra.mxu0 0.0
    %758 = vmatprep.subr.mxu0 %v558
    %759 = vmatpush1.msra.mxu0 %v557
    %760 = vmatprep.subr.mxu0 %v555
    %761 = vmatpush1.msra.mxu0 %v554
    %762 = vmatprep.subr.mxu0 %v552
    %763 = vmatpush1.msra.mxu0 %v551
    %764 = vmatprep.subr.mxu0 %v549
    %765 = vmatpush1.msra.mxu0 %v548
    %766 = vmatprep.subr.mxu0 %v546
    %767 = vmatpush1.msra.mxu0 %v545
    %768 = vmatprep.subr.mxu0 %v543
    %769 = vmatpush1.msra.mxu0 %v542
    %770 = vmatprep.subr.mxu0 0.0
    %771 = vmatpush2.msra.mxu0 0.0
    %772 = vmatprep.subr.mxu0 0.0
    %773 = vmatpush2.msra.mxu0 0.0
    %774 = vmatprep.subr.mxu0 0.0
    %775 = vmatpush2.msra.mxu0 0.0
    %776 = vmatprep.subr.mxu0 0.0
    %777 = vmatpush2.msra.mxu0 0.0
    %778 = vmatprep.subr.mxu0 0.0
    %779 = vmatpush2.msra.mxu0 0.0
    %780 = vmatprep.subr.mxu0 0.0
    %781 = vmatpush2.msra.mxu0 0.0
    %782 = vmatprep.subr.mxu0 0.0
    %783 = vmatpush2.msra.mxu0 0.0
    %784 = vmatprep.subr.mxu0 0.0
    %785 = vmatpush2.msra.mxu0 0.0
    %786 = vmatprep.subr.mxu0 0.0
    %787 = vmatpush2.msra.mxu0 0.0
    %788 = vmatprep.subr.mxu0 0.0
    %789 = vmatpush2.msra.mxu0 0.0
    %790 = vmatprep.subr.mxu0 0.0
    %791 = vmatpush2.msra.mxu0 0.0
    %792 = vmatprep.subr.mxu0 0.0
    %793 = vmatpush2.msra.mxu0 0.0
    %794 = vmatprep.subr.mxu0 0.0
    %795 = vmatpush2.msra.mxu0 0.0
    %796 = vmatprep.subr.mxu0 0.0
    %797 = vmatpush2.msra.mxu0 0.0
    %798 = vmatprep.subr.mxu0 0.0
    %799 = vmatpush2.msra.mxu0 0.0
    %800 = vmatprep.subr.mxu0 0.0
    %801 = vmatpush2.msra.mxu0 0.0
    %802 = vmatprep.mubr.f32.mxu0 0.0
    %803 = vmatmul.mubr.f32.gmra.mxu0 %v579
    %v804 = vpop.f32.mrf.mxu0
    %v805 = vadd.f32 %v728, %v804
    %v806 = vpop.f32.mrf.mxu0
    %v807 = vadd.f32 %v730, %v806
    %808 = vmatprep.mubr.f32.mxu0 0.0
    %809 = vmatmul.mubr.f32.gmra.mxu0 %v582
    %v810 = vpop.f32.mrf.mxu0
    %v811 = vadd.f32 %v734, %v810
    %v812 = vpop.f32.mrf.mxu0
    %v813 = vadd.f32 %v736, %v812
    %814 = vdwg.mxu0
    %815 = vmatprep.subr.mxu0 0.0
    %816 = vmatpush1.msra.mxu0 %v397
    %817 = vmatprep.subr.mxu0 0.0
    %818 = vmatpush1.msra.mxu0 %v394
    %819 = vmatprep.subr.mxu0 0.0
    %820 = vmatpush1.msra.mxu0 %v391
    %821 = vmatprep.subr.mxu0 0.0
    %822 = vmatpush1.msra.mxu0 %v388
    %823 = vmatprep.subr.mxu0 0.0
    %824 = vmatpush1.msra.mxu0 %v385
    %825 = vmatprep.subr.mxu0 0.0
    %826 = vmatpush1.msra.mxu0 %v382
    %827 = vmatprep.subr.mxu0 0.0
    %828 = vmatpush1.msra.mxu0 %v379
    %829 = vmatprep.subr.mxu0 0.0
    %830 = vmatpush1.msra.mxu0 %v376
    %831 = vmatprep.subr.mxu0 0.0
    %832 = vmatpush1.msra.mxu0 %v373
    %833 = vmatprep.subr.mxu0 0.0
    %834 = vmatpush1.msra.mxu0 %v370
    %835 = vmatprep.subr.mxu0 0.0
    %836 = vmatpush1.msra.mxu0 %v367
    %837 = vmatprep.subr.mxu0 0.0
    %838 = vmatpush1.msra.mxu0 %v364
    %839 = vmatprep.subr.mxu0 0.0
    %840 = vmatpush1.msra.mxu0 %v361
    %841 = vmatprep.subr.mxu0 0.0
    %842 = vmatpush1.msra.mxu0 %v358
    %843 = vmatprep.subr.mxu0 0.0
    %844 = vmatpush1.msra.mxu0 %v355
    %845 = vmatprep.subr.mxu0 0.0
    %846 = vmatpush1.msra.mxu0 %v352
    %847 = vmatprep.subr.mxu0 0.0
    %848 = vmatpush2.msra.mxu0 %v445
    %849 = vmatprep.subr.mxu0 0.0
    %850 = vmatpush2.msra.mxu0 %v442
    %851 = vmatprep.subr.mxu0 0.0
    %852 = vmatpush2.msra.mxu0 %v439
    %853 = vmatprep.subr.mxu0 0.0
    %854 = vmatpush2.msra.mxu0 %v436
    %855 = vmatprep.subr.mxu0 0.0
    %856 = vmatpush2.msra.mxu0 %v433
    %857 = vmatprep.subr.mxu0 0.0
    %858 = vmatpush2.msra.mxu0 %v430
    %859 = vmatprep.subr.mxu0 0.0
    %860 = vmatpush2.msra.mxu0 %v427
    %861 = vmatprep.subr.mxu0 0.0
    %862 = vmatpush2.msra.mxu0 %v424
    %863 = vmatprep.subr.mxu0 0.0
    %864 = vmatpush2.msra.mxu0 %v421
    %865 = vmatprep.subr.mxu0 0.0
    %866 = vmatpush2.msra.mxu0 %v418
    %867 = vmatprep.subr.mxu0 0.0
    %868 = vmatpush2.msra.mxu0 %v415
    %869 = vmatprep.subr.mxu0 0.0
    %870 = vmatpush2.msra.mxu0 %v412
    %871 = vmatprep.subr.mxu0 0.0
    %872 = vmatpush2.msra.mxu0 %v409
    %873 = vmatprep.subr.mxu0 0.0
    %874 = vmatpush2.msra.mxu0 %v406
    %875 = vmatprep.subr.mxu0 0.0
    %876 = vmatpush2.msra.mxu0 %v403
    %877 = vmatprep.subr.mxu0 0.0
    %878 = vmatpush2.msra.mxu0 %v400
    %879 = vmatprep.mubr.f32.mxu0 %v341
    %880 = vmatmul.mubr.f32.gmra.mxu0 %v340
    %v881 = vpop.f32.mrf.mxu0
    %v882 = vadd.f32 %v573, %v881
    %v883 = vpop.f32.mrf.mxu0
    %884 = vmatprep.mubr.f32.mxu0 %v346
    %885 = vmatmul.mubr.f32.gmra.mxu0 %v345
    %v886 = vpop.f32.mrf.mxu0
    %v887 = vadd.f32 %v573, %v886
    %v888 = vpop.f32.mrf.mxu0
    %889 = vdwg.mxu0
    %890 = vmatprep.subr.mxu0 0.0
    %891 = vmatpush1.msra.mxu0 %v493
    %892 = vmatprep.subr.mxu0 0.0
    %893 = vmatpush1.msra.mxu0 %v490
    %894 = vmatprep.subr.mxu0 0.0
    %895 = vmatpush1.msra.mxu0 %v487
    %896 = vmatprep.subr.mxu0 0.0
    %897 = vmatpush1.msra.mxu0 %v484
    %898 = vmatprep.subr.mxu0 0.0
    %899 = vmatpush1.msra.mxu0 %v481
    %900 = vmatprep.subr.mxu0 0.0
    %901 = vmatpush1.msra.mxu0 %v478
    %902 = vmatprep.subr.mxu0 0.0
    %903 = vmatpush1.msra.mxu0 %v475
    %904 = vmatprep.subr.mxu0 0.0
    %905 = vmatpush1.msra.mxu0 %v472
    %906 = vmatprep.subr.mxu0 0.0
    %907 = vmatpush1.msra.mxu0 %v469
    %908 = vmatprep.subr.mxu0 0.0
    %909 = vmatpush1.msra.mxu0 %v466
    %910 = vmatprep.subr.mxu0 0.0
    %911 = vmatpush1.msra.mxu0 %v463
    %912 = vmatprep.subr.mxu0 0.0
    %913 = vmatpush1.msra.mxu0 %v460
    %914 = vmatprep.subr.mxu0 0.0
    %915 = vmatpush1.msra.mxu0 %v457
    %916 = vmatprep.subr.mxu0 0.0
    %917 = vmatpush1.msra.mxu0 %v454
    %918 = vmatprep.subr.mxu0 0.0
    %919 = vmatpush1.msra.mxu0 %v451
    %920 = vmatprep.subr.mxu0 0.0
    %921 = vmatpush1.msra.mxu0 %v448
    %922 = vmatprep.subr.mxu0 0.0
    %923 = vmatpush2.msra.mxu0 %v541
    %924 = vmatprep.subr.mxu0 0.0
    %925 = vmatpush2.msra.mxu0 %v538
    %926 = vmatprep.subr.mxu0 0.0
    %927 = vmatpush2.msra.mxu0 %v535
    %928 = vmatprep.subr.mxu0 0.0
    %929 = vmatpush2.msra.mxu0 %v532
    %930 = vmatprep.subr.mxu0 0.0
    %931 = vmatpush2.msra.mxu0 %v529
    %932 = vmatprep.subr.mxu0 0.0
    %933 = vmatpush2.msra.mxu0 %v526
    %934 = vmatprep.subr.mxu0 0.0
    %935 = vmatpush2.msra.mxu0 %v523
    %936 = vmatprep.subr.mxu0 0.0
    %937 = vmatpush2.msra.mxu0 %v520
    %938 = vmatprep.subr.mxu0 0.0
    %939 = vmatpush2.msra.mxu0 %v517
    %940 = vmatprep.subr.mxu0 0.0
    %941 = vmatpush2.msra.mxu0 %v514
    %942 = vmatprep.subr.mxu0 0.0
    %943 = vmatpush2.msra.mxu0 %v511
    %944 = vmatprep.subr.mxu0 0.0
    %945 = vmatpush2.msra.mxu0 %v508
    %946 = vmatprep.subr.mxu0 0.0
    %947 = vmatpush2.msra.mxu0 %v505
    %948 = vmatprep.subr.mxu0 0.0
    %949 = vmatpush2.msra.mxu0 %v502
    %950 = vmatprep.subr.mxu0 0.0
    %951 = vmatpush2.msra.mxu0 %v499
    %952 = vmatprep.subr.mxu0 0.0
    %953 = vmatpush2.msra.mxu0 %v496
    %954 = vmatprep.mubr.f32.mxu0 %v343
    %955 = vmatmul.mubr.f32.gmra.mxu0 %v342
    %v956 = vpop.f32.mrf.mxu0
    %v957 = vadd.f32 %v882, %v956
    %v958 = vpop.f32.mrf.mxu0
    %959 = vmatprep.mubr.f32.mxu0 %v348
    %960 = vmatmul.mubr.f32.gmra.mxu0 %v347
    %v961 = vpop.f32.mrf.mxu0
    %v962 = vadd.f32 %v887, %v961
    %v963 = vpop.f32.mrf.mxu0
    %964 = vdwg.mxu0
    %965 = vmatprep.subr.mxu0 0.0
    %966 = vmatpush1.msra.mxu0 0.0
    %967 = vmatprep.subr.mxu0 0.0
    %968 = vmatpush1.msra.mxu0 0.0
    %969 = vmatprep.subr.mxu0 0.0
    %970 = vmatpush1.msra.mxu0 0.0
    %971 = vmatprep.subr.mxu0 0.0
    %972 = vmatpush1.msra.mxu0 0.0
    %973 = vmatprep.subr.mxu0 0.0
    %974 = vmatpush1.msra.mxu0 0.0
    %975 = vmatprep.subr.mxu0 0.0
    %976 = vmatpush1.msra.mxu0 0.0
    %977 = vmatprep.subr.mxu0 0.0
    %978 = vmatpush1.msra.mxu0 0.0
    %979 = vmatprep.subr.mxu0 0.0
    %980 = vmatpush1.msra.mxu0 0.0
    %981 = vmatprep.subr.mxu0 0.0
    %982 = vmatpush1.msra.mxu0 0.0
    %983 = vmatprep.subr.mxu0 0.0
    %984 = vmatpush1.msra.mxu0 0.0
    %985 = vmatprep.subr.mxu0 0.0
    %986 = vmatpush1.msra.mxu0 %v559
    %987 = vmatprep.subr.mxu0 0.0
    %988 = vmatpush1.msra.mxu0 %v556
    %989 = vmatprep.subr.mxu0 0.0
    %990 = vmatpush1.msra.mxu0 %v553
    %991 = vmatprep.subr.mxu0 0.0
    %992 = vmatpush1.msra.mxu0 %v550
    %993 = vmatprep.subr.mxu0 0.0
    %994 = vmatpush1.msra.mxu0 %v547
    %995 = vmatprep.subr.mxu0 0.0
    %996 = vmatpush1.msra.mxu0 %v544
    %997 = vmatprep.subr.mxu0 0.0
    %998 = vmatpush2.msra.mxu0 0.0
    %999 = vmatprep.subr.mxu0 0.0
    %1000 = vmatpush2.msra.mxu0 0.0
    %1001 = vmatprep.subr.mxu0 0.0
    %1002 = vmatpush2.msra.mxu0 0.0
    %1003 = vmatprep.subr.mxu0 0.0
    %1004 = vmatpush2.msra.mxu0 0.0
    %1005 = vmatprep.subr.mxu0 0.0
    %1006 = vmatpush2.msra.mxu0 0.0
    %1007 = vmatprep.subr.mxu0 0.0
    %1008 = vmatpush2.msra.mxu0 0.0
    %1009 = vmatprep.subr.mxu0 0.0
    %1010 = vmatpush2.msra.mxu0 0.0
    %1011 = vmatprep.subr.mxu0 0.0
    %1012 = vmatpush2.msra.mxu0 0.0
    %1013 = vmatprep.subr.mxu0 0.0
    %1014 = vmatpush2.msra.mxu0 0.0
    %1015 = vmatprep.subr.mxu0 0.0
    %1016 = vmatpush2.msra.mxu0 0.0
    %1017 = vmatprep.subr.mxu0 0.0
    %1018 = vmatpush2.msra.mxu0 0.0
    %1019 = vmatprep.subr.mxu0 0.0
    %1020 = vmatpush2.msra.mxu0 0.0
    %1021 = vmatprep.subr.mxu0 0.0
    %1022 = vmatpush2.msra.mxu0 0.0
    %1023 = vmatprep.subr.mxu0 0.0
    %1024 = vmatpush2.msra.mxu0 0.0
    %1025 = vmatprep.subr.mxu0 0.0
    %1026 = vmatpush2.msra.mxu0 0.0
    %1027 = vmatprep.subr.mxu0 0.0
    %1028 = vmatpush2.msra.mxu0 0.0
    %1029 = vmatprep.mubr.f32.mxu0 0.0
    %1030 = vmatmul.mubr.f32.gmra.mxu0 %v579
    %v1031 = vpop.f32.mrf.mxu0
    %v1032 = vadd.f32 %v957, %v1031
    %v1033 = vpop.f32.mrf.mxu0
    %1034 = vmatprep.mubr.f32.mxu0 0.0
    %1035 = vmatmul.mubr.f32.gmra.mxu0 %v582
    %v1036 = vpop.f32.mrf.mxu0
    %v1037 = vadd.f32 %v962, %v1036
    %v1038 = vpop.f32.mrf.mxu0
    %1039 = vdwg.mxu0
    %v1040 = vxor.u32 %v807, 2147483648
    %v1041 = vxor.u32 %v1032, 2147483648
    %v1042 = vxor.u32 %v813, 2147483648
    %v1043 = vxor.u32 %v1037, 2147483648
    %v1044 = vmul.f32 %v1040, 1.442695
    %v1045 = vpow.pop %v1044
    %v1046 = vmul.f32 %v1041, 1.442695
    %v1047 = vpow.pop %v1046
    %v1048 = vmul.f32 %v1042, 1.442695
    %v1049 = vpow.pop %v1048
    %v1050 = vmul.f32 %v1043, 1.442695
    %v1051 = vpow.pop %v1050
    %v1052 = vadd.f32 %v1045, 1.0
    %v1053 = vadd.f32 %v1047, 1.0
    %v1054 = vadd.f32 %v1049, 1.0
    %v1055 = vadd.f32 %v1051, 1.0
    %v1056 = vrcp.pop %v1052
    %v1057 = vmul.f32 1.0, %v1056
    %v1058 = vrcp.pop %v1053
    %v1059 = vmul.f32 1.0, %v1058
    %v1060 = vrcp.pop %v1054
    %v1061 = vmul.f32 1.0, %v1060
    %v1062 = vrcp.pop %v1055
    %v1063 = vmul.f32 1.0, %v1062
    %1068 = vrot.lane.b32.xlu0 %v805, 64
    %v1069 = vpop.permute.xlu0 %1068
    %1070 = vrot.lane.b32.xlu0 %v807, 64
    %v1071 = vpop.permute.xlu0 %1070
    %1072 = vrot.lane.b32.xlu0 %v811, 64
    %v1073 = vpop.permute.xlu0 %1072
    %1074 = vrot.lane.b32.xlu0 %v813, 64
    %v1075 = vpop.permute.xlu0 %1074
    %vm1076 = vcmask 523264
    %v1077 = vsel %vm1076, %v1069, %v1071
    %v1078 = vsel %vm1076, %v1073, %v1075
    %v1083 = vmul.f32 %v1057, %v1069
    %v1084 = vmul.f32 %v1059, %v1077
    %v1085 = vmul.f32 %v1061, %v1073
    %v1086 = vmul.f32 %v1063, %v1078
    %v1087 = vmax.f32 %v1083, 0.0
    %v1088 = vmax.f32 %v1084, 0.0
    %v1089 = vmax.f32 %v1085, 0.0
    %v1090 = vmax.f32 %v1086, 0.0
    %1095 = vrot.lane.b32.xlu0 %v1087, 64
    %v1096 = vpop.permute.xlu0 %1095
    %1097 = vrot.lane.b32.xlu0 %v1088, 64
    %v1098 = vpop.permute.xlu0 %1097
    %1099 = vrot.lane.b32.xlu0 %v1089, 64
    %v1100 = vpop.permute.xlu0 %1099
    %1101 = vrot.lane.b32.xlu0 %v1090, 64
    %v1102 = vpop.permute.xlu0 %1101
    %v1103 = vsel %vm1076, %v1096, %v1098
    %v1104 = vsel %vm1076, %v1100, %v1102
    %1109 = vst [vmem:[%s4] sm:$0xff] %v1103
    %1110 = vst.msk [vmem:[%s4 + $0x8] sm:$0xff] %vm1076, %v1098
    %1111 = vst [vmem:[%s4 + $0x10] sm:$0xff] %v1104
    %1112 = vst.msk [vmem:[%s4 + $0x18] sm:$0xff] %vm1076, %v1102
    // Predicated region
    $region22: #{meta_time_block_forward.1} parent=1 // pred_check
      _
    $region23: #{meta_time_block_forward.1} parent=1 // pred_check_branch
      %1114 = sbr.rel (0) target = $region25
    $region24: #{meta_time_block_forward.1} parent=1 // pred_region
      _
    $region25: #{meta_time_block_forward.1} parent=1 // pred_fallthru
      _
    // Predicated region
    $region26: #{meta_time_block_forward.1} parent=1 // pred_check
      _
    $region27: #{meta_time_block_forward.1} parent=1 // pred_check_branch
      %1116 = sbr.rel (0) target = $region29
    $region28: #{meta_time_block_forward.1} parent=1 // pred_region
      _
    $region29: #{meta_time_block_forward.1} parent=1 // pred_fallthru
      _
    %1117 = vsyncpa [#allocation4], 1

</llo_original>
